<compile_context>
chip_gen: v7x
topology: tpu7x:2x2x1
jax: 0.10.0
libtpu: 0.0.40
codegen_flags: <defaults>
</compile_context>

<pallas_src>
import jax
import jax.numpy as jnp
from jax.experimental import pallas as pl
from jax.experimental.pallas import tpu as pltpu

SUBLANE = 8
LANE = 128


def make_rnn_linear_kernel(seq, batch_p):
    """Builds the kernel closure for a fixed (static) seq length / padded batch."""

    def rnn_linear_kernel(emb_ref, w_ih_ref, w_hh_ref, b_rnn_ref,
                          w_lin_ref, b_lin_ref, out_ref):
        """
        emb_ref:   (seq*batch_p, vector_dim)  bf16   time-major, batch padded to 8
        w_ih_ref:  (vector_dim, hidden)       bf16   == PyTorch weight_ih_l0.T
        w_hh_ref:  (hidden, hidden)           bf16   == PyTorch weight_hh_l0.T
        b_rnn_ref: (1, hidden)                f32    (b_ih + b_hh combined)
        w_lin_ref: (hidden, out_pad)          bf16   == linear.weight.T, lane-padded
        b_lin_ref: (1, out_pad)               f32    lane-padded
        out_ref:   (batch_p, out_pad)         f32
        """
        hidden = w_hh_ref.shape[0]

        # --- Hoisted input projection (one matmul for all timesteps, bias folded in).
        xw = (jnp.dot(emb_ref[...], w_ih_ref[...],
                      preferred_element_type=jnp.float32)
              + b_rnn_ref[...])                      # (seq*batch_p, hidden) f32

        w_hh = w_hh_ref[...]                         # loaded once, bf16

        # --- Serial recurrence; h stays in vregs (no VMEM round-trip per step).
        # h0 = 0 (PyTorch default) => step 0 needs no h @ W_hh matmul.
        h = jnp.tanh(xw[0:batch_p, :])
        for t in range(1, seq):                      # static unroll (seq is small)
            pre = xw[t * batch_p:(t + 1) * batch_p, :] + jnp.dot(
                h.astype(jnp.bfloat16), w_hh, preferred_element_type=jnp.float32)
            h = jnp.tanh(pre)                        # f32 tanh on EUP

        # --- Final projection on the last hidden state; lane-dense padded store.
        out_ref[...] = (jnp.dot(h.astype(jnp.bfloat16), w_lin_ref[...],
                                preferred_element_type=jnp.float32)
                        + b_lin_ref[...]).astype(out_ref.dtype)

    return rnn_linear_kernel


def position_predictor_forward(x_ids, params):
    """x_ids: (batch, seq) int32 token ids. Returns (batch, sentence_length) f32."""
    emb_table = params["embedding"]                  # (vocab, vector_dim) f32
    vector_dim = emb_table.shape[1]
    hidden = params["w_hh"].shape[0]
    sentence_length = params["w_lin"].shape[1]
    batch, seq = x_ids.shape

    batch_p = max(SUBLANE, pl.cdiv(batch, SUBLANE) * SUBLANE)
    out_p = max(LANE, pl.cdiv(sentence_length, LANE) * LANE)

    # Embedding lookup (glue; gather at this tiny size stays in plain JAX),
    # time-major, batch padded to sublane width, flattened so the hoisted input
    # projection is a single matmul inside the kernel.
    # TODO(synk): could move the gather in-kernel via PrefetchScalarGridSpec if scaled up.
    emb = jnp.take(emb_table, x_ids, axis=0)         # (B, S, D)
    emb_tm = jnp.transpose(emb, (1, 0, 2))           # (S, B, D)
    emb_tm = jnp.pad(emb_tm, ((0, 0), (0, batch_p - batch), (0, 0)))
    emb_flat = emb_tm.reshape(seq * batch_p, vector_dim).astype(jnp.bfloat16)

    # Weights as bf16 MXU operands; biases stay f32 (accumulation + tanh in f32).
    w_ih = params["w_ih"].astype(jnp.bfloat16)                       # (D, H)
    w_hh = params["w_hh"].astype(jnp.bfloat16)                       # (H, H)
    w_lin = jnp.pad(params["w_lin"],
                    ((0, 0), (0, out_p - sentence_length))).astype(jnp.bfloat16)
    b_rnn = (params["b_ih"] + params["b_hh"]).reshape(1, hidden).astype(jnp.float32)
    b_lin = jnp.pad(params["b_lin"],
                    (0, out_p - sentence_length)).reshape(1, out_p).astype(jnp.float32)

    vmem = pl.BlockSpec(memory_space=pltpu.MemorySpace.VMEM)

    out = pl.pallas_call(
        make_rnn_linear_kernel(seq, batch_p),
        out_shape=jax.ShapeDtypeStruct((batch_p, out_p), jnp.float32),
        in_specs=[vmem] * 6,
        out_specs=vmem,
    )(emb_flat, w_ih, w_hh, b_rnn, w_lin, b_lin)

    return out[:batch, :sentence_length]


def init_params(key, vocab_size, vector_dim, hidden, sentence_length):
    ks = jax.random.split(key, 7)
    scale = 0.1
    return {
        "embedding": scale * jax.random.normal(ks[0], (vocab_size, vector_dim), jnp.float32),
        "w_ih":      scale * jax.random.normal(ks[1], (vector_dim, hidden), jnp.float32),
        "w_hh":      scale * jax.random.normal(ks[2], (hidden, hidden), jnp.float32),
        "b_ih":      scale * jax.random.normal(ks[3], (hidden,), jnp.float32),
        "b_hh":      scale * jax.random.normal(ks[4], (hidden,), jnp.float32),
        "w_lin":     scale * jax.random.normal(ks[5], (hidden, sentence_length), jnp.float32),
        "b_lin":     scale * jax.random.normal(ks[6], (sentence_length,), jnp.float32),
    }


def reference_forward(x_ids, params):
    """Pure-JAX f32 reference matching PyTorch semantics."""
    emb = jnp.take(params["embedding"], x_ids, axis=0)          # (B, S, D)
    batch = x_ids.shape[0]
    hidden = params["w_hh"].shape[0]
    h = jnp.zeros((batch, hidden), jnp.float32)
    b = params["b_ih"] + params["b_hh"]
    for t in range(x_ids.shape[1]):
        h = jnp.tanh(emb[:, t, :] @ params["w_ih"] + h @ params["w_hh"] + b)
    return h @ params["w_lin"] + params["b_lin"]


if __name__ == "__main__":
    vocab_size = 20
    vector_dim = 32
    hidden = 128            # fixed by nn.RNN(hidden_size=128)
    sentence_length = 8
    batch = 2
    seq = sentence_length   # inputs are sentences of length `sentence_length`

    key = jax.random.PRNGKey(0)
    pkey, xkey = jax.random.split(key)
    params = init_params(pkey, vocab_size, vector_dim, hidden, sentence_length)

    x_ids = jax.random.randint(xkey, (batch, seq), 0, vocab_size, dtype=jnp.int32)

    out = position_predictor_forward(x_ids, params)
    out = jax.block_until_ready(out)

    ref = reference_forward(x_ids, params)
    assert out.shape == (batch, sentence_length)
    # Looser tolerance: kernel uses bf16 MXU operands with f32 accumulation.
    assert jnp.allclose(out, ref, atol=3e-2, rtol=3e-2), "mismatch vs reference"

    print("KERNEL_OK")
</pallas_src>

<mosaic_0001>
module attributes {stable_mosaic.version = 11 : i64} {
  func.func @rnn_linear_kernel(%arg0: memref<64x32xbf16, #tpu.memory_space<vmem>>, %arg1: memref<32x128xbf16, #tpu.memory_space<vmem>>, %arg2: memref<128x128xbf16, #tpu.memory_space<vmem>>, %arg3: memref<1x128xf32, #tpu.memory_space<vmem>>, %arg4: memref<128x128xbf16, #tpu.memory_space<vmem>>, %arg5: memref<1x128xf32, #tpu.memory_space<vmem>>, %arg6: memref<8x128xf32, #tpu.memory_space<vmem>>) attributes {dimension_semantics = [], scalar_prefetch = 0 : i64, scratch_operands = 0 : i64, tpu.core_type = #tpu.core_type<tc>} {
    %c0 = arith.constant 0 : index
    %c0_0 = arith.constant 0 : index
    %0 = vector.load %arg0[%c0, %c0_0] : memref<64x32xbf16, #tpu.memory_space<vmem>>, vector<64x32xbf16>
    %c0_1 = arith.constant 0 : index
    %c0_2 = arith.constant 0 : index
    %1 = vector.load %arg1[%c0_1, %c0_2] : memref<32x128xbf16, #tpu.memory_space<vmem>>, vector<32x128xbf16>
    %cst = arith.constant dense<0.000000e+00> : vector<64x128xf32>
    %2 = tpu.matmul %0, %1, %cst {dimension_numbers = #tpu.dot_dimension_numbers<[1], [0], [0], [1], [0, 0, 1, 1], [], []>} : vector<64x32xbf16>, vector<32x128xbf16>, vector<64x128xf32> -> vector<64x128xf32>
    %c0_3 = arith.constant 0 : index
    %c0_4 = arith.constant 0 : index
    %3 = vector.load %arg3[%c0_3, %c0_4] : memref<1x128xf32, #tpu.memory_space<vmem>>, vector<1x128xf32>
    %4 = vector.broadcast %3 : vector<1x128xf32> to vector<64x128xf32>
    %5 = arith.addf %2, %4 : vector<64x128xf32>
    %c0_5 = arith.constant 0 : index
    %c0_6 = arith.constant 0 : index
    %6 = vector.load %arg2[%c0_5, %c0_6] : memref<128x128xbf16, #tpu.memory_space<vmem>>, vector<128x128xbf16>
    %7 = vector.extract_strided_slice %5 {offsets = [0, 0], sizes = [8, 128], strides = [1, 1]} : vector<64x128xf32> to vector<8x128xf32>
    %8 = math.tanh %7 : vector<8x128xf32>
    %9 = vector.extract_strided_slice %5 {offsets = [8, 0], sizes = [8, 128], strides = [1, 1]} : vector<64x128xf32> to vector<8x128xf32>
    %10 = arith.truncf %8 : vector<8x128xf32> to vector<8x128xbf16>
    %cst_7 = arith.constant dense<0.000000e+00> : vector<8x128xf32>
    %11 = tpu.matmul %10, %6, %cst_7 {dimension_numbers = #tpu.dot_dimension_numbers<[1], [0], [0], [1], [0, 0, 1, 1], [], []>} : vector<8x128xbf16>, vector<128x128xbf16>, vector<8x128xf32> -> vector<8x128xf32>
    %12 = arith.addf %9, %11 : vector<8x128xf32>
    %13 = math.tanh %12 : vector<8x128xf32>
    %14 = vector.extract_strided_slice %5 {offsets = [16, 0], sizes = [8, 128], strides = [1, 1]} : vector<64x128xf32> to vector<8x128xf32>
    %15 = arith.truncf %13 : vector<8x128xf32> to vector<8x128xbf16>
    %cst_8 = arith.constant dense<0.000000e+00> : vector<8x128xf32>
    %16 = tpu.matmul %15, %6, %cst_8 {dimension_numbers = #tpu.dot_dimension_numbers<[1], [0], [0], [1], [0, 0, 1, 1], [], []>} : vector<8x128xbf16>, vector<128x128xbf16>, vector<8x128xf32> -> vector<8x128xf32>
    %17 = arith.addf %14, %16 : vector<8x128xf32>
    %18 = math.tanh %17 : vector<8x128xf32>
    %19 = vector.extract_strided_slice %5 {offsets = [24, 0], sizes = [8, 128], strides = [1, 1]} : vector<64x128xf32> to vector<8x128xf32>
    %20 = arith.truncf %18 : vector<8x128xf32> to vector<8x128xbf16>
    %cst_9 = arith.constant dense<0.000000e+00> : vector<8x128xf32>
    %21 = tpu.matmul %20, %6, %cst_9 {dimension_numbers = #tpu.dot_dimension_numbers<[1], [0], [0], [1], [0, 0, 1, 1], [], []>} : vector<8x128xbf16>, vector<128x128xbf16>, vector<8x128xf32> -> vector<8x128xf32>
    %22 = arith.addf %19, %21 : vector<8x128xf32>
    %23 = math.tanh %22 : vector<8x128xf32>
    %24 = vector.extract_strided_slice %5 {offsets = [32, 0], sizes = [8, 128], strides = [1, 1]} : vector<64x128xf32> to vector<8x128xf32>
    %25 = arith.truncf %23 : vector<8x128xf32> to vector<8x128xbf16>
    %cst_10 = arith.constant dense<0.000000e+00> : vector<8x128xf32>
    %26 = tpu.matmul %25, %6, %cst_10 {dimension_numbers = #tpu.dot_dimension_numbers<[1], [0], [0], [1], [0, 0, 1, 1], [], []>} : vector<8x128xbf16>, vector<128x128xbf16>, vector<8x128xf32> -> vector<8x128xf32>
    %27 = arith.addf %24, %26 : vector<8x128xf32>
    %28 = math.tanh %27 : vector<8x128xf32>
    %29 = vector.extract_strided_slice %5 {offsets = [40, 0], sizes = [8, 128], strides = [1, 1]} : vector<64x128xf32> to vector<8x128xf32>
    %30 = arith.truncf %28 : vector<8x128xf32> to vector<8x128xbf16>
    %cst_11 = arith.constant dense<0.000000e+00> : vector<8x128xf32>
    %31 = tpu.matmul %30, %6, %cst_11 {dimension_numbers = #tpu.dot_dimension_numbers<[1], [0], [0], [1], [0, 0, 1, 1], [], []>} : vector<8x128xbf16>, vector<128x128xbf16>, vector<8x128xf32> -> vector<8x128xf32>
    %32 = arith.addf %29, %31 : vector<8x128xf32>
    %33 = math.tanh %32 : vector<8x128xf32>
    %34 = vector.extract_strided_slice %5 {offsets = [48, 0], sizes = [8, 128], strides = [1, 1]} : vector<64x128xf32> to vector<8x128xf32>
    %35 = arith.truncf %33 : vector<8x128xf32> to vector<8x128xbf16>
    %cst_12 = arith.constant dense<0.000000e+00> : vector<8x128xf32>
    %36 = tpu.matmul %35, %6, %cst_12 {dimension_numbers = #tpu.dot_dimension_numbers<[1], [0], [0], [1], [0, 0, 1, 1], [], []>} : vector<8x128xbf16>, vector<128x128xbf16>, vector<8x128xf32> -> vector<8x128xf32>
    %37 = arith.addf %34, %36 : vector<8x128xf32>
    %38 = math.tanh %37 : vector<8x128xf32>
    %39 = vector.extract_strided_slice %5 {offsets = [56, 0], sizes = [8, 128], strides = [1, 1]} : vector<64x128xf32> to vector<8x128xf32>
    %40 = arith.truncf %38 : vector<8x128xf32> to vector<8x128xbf16>
    %cst_13 = arith.constant dense<0.000000e+00> : vector<8x128xf32>
    %41 = tpu.matmul %40, %6, %cst_13 {dimension_numbers = #tpu.dot_dimension_numbers<[1], [0], [0], [1], [0, 0, 1, 1], [], []>} : vector<8x128xbf16>, vector<128x128xbf16>, vector<8x128xf32> -> vector<8x128xf32>
    %42 = arith.addf %39, %41 : vector<8x128xf32>
    %43 = math.tanh %42 : vector<8x128xf32>
    %44 = arith.truncf %43 : vector<8x128xf32> to vector<8x128xbf16>
    %c0_14 = arith.constant 0 : index
    %c0_15 = arith.constant 0 : index
    %45 = vector.load %arg4[%c0_14, %c0_15] : memref<128x128xbf16, #tpu.memory_space<vmem>>, vector<128x128xbf16>
    %cst_16 = arith.constant dense<0.000000e+00> : vector<8x128xf32>
    %46 = tpu.matmul %44, %45, %cst_16 {dimension_numbers = #tpu.dot_dimension_numbers<[1], [0], [0], [1], [0, 0, 1, 1], [], []>} : vector<8x128xbf16>, vector<128x128xbf16>, vector<8x128xf32> -> vector<8x128xf32>
    %c0_17 = arith.constant 0 : index
    %c0_18 = arith.constant 0 : index
    %47 = vector.load %arg5[%c0_17, %c0_18] : memref<1x128xf32, #tpu.memory_space<vmem>>, vector<1x128xf32>
    %48 = vector.broadcast %47 : vector<1x128xf32> to vector<8x128xf32>
    %49 = arith.addf %46, %48 : vector<8x128xf32>
    %c0_19 = arith.constant 0 : index
    %c0_20 = arith.constant 0 : index
    %50 = vector.load %arg6[%c0_19, %c0_20] : memref<8x128xf32, #tpu.memory_space<vmem>>, vector<8x128xf32>
    tpu.vector_store %arg6[%c0_19, %c0_20], %49 {strides = array<i32>} : memref<8x128xf32, #tpu.memory_space<vmem>>, vector<8x128xf32>,
    return
  }
}

</mosaic_0001>

<llo_original>
// kernel: tpu_custom_call.1
$region0: #{tpu_custom_call.1}
  #allocation0 [shape = 'u32[]', space=smem, size = 0x4, offset = 0x4, fixed_abs, tag = 'smem constant byte address 0x4 - core index']
  #allocation1 [shape = 'u32[144,128]{1,0:T(1,128)}', space=vmem, size = 0x12000, scoped, tag = 'internal scratch']
  %s0 = inlined_call_operand.vmem [shape: bf16[64,32], index: 0, kind: input, shape index: {}]
  %s1 = inlined_call_operand.vmem [shape: bf16[32,128], index: 1, kind: input, shape index: {}]
  %s2 = inlined_call_operand.hbm [shape: bf16[128,128], index: 2, kind: input, shape index: {}]
  %s3 = inlined_call_operand.vmem [shape: f32[1,128], index: 3, kind: input, shape index: {}]
  %s4 = inlined_call_operand.hbm [shape: bf16[128,128], index: 4, kind: input, shape index: {}]
  %s5 = inlined_call_operand.vmem [shape: f32[1,128], index: 5, kind: input, shape index: {}]
  %s6 = inlined_call_operand.hbm [shape: f32[8,128], index: 6, kind: output, shape index: {}]
  %s7 = sld [smem:[#allocation0]]
  $region42: #{tpu_custom_call.1} parent=0
    _
  %s9 = ssub.s32 1, %s7
  %s10 = scalar_select 0, %s9, %s7
  $region1: #{tpu_custom_call.1} parent=0
    #allocation2 [shape = 'u8[32768]{0}', space=vmem, size = 0x8000, scoped, tag = 'input window, operand 2, single buffered']
    #allocation3 [shape = 's32[1]{0}', space=sflag, size = 0x4, scoped, tag = 'scoped memory for tpu_custom_call.1']
    #allocation4 [shape = 's32[1]{0}', space=sflag, size = 0x4, scoped, tag = 'scoped memory for tpu_custom_call.1']
    #allocation5 [shape = 'u8[32768]{0}', space=vmem, size = 0x8000, scoped, tag = 'input window, operand 4, single buffered']
    #allocation6 [shape = 's32[1]{0}', space=sflag, size = 0x4, scoped, tag = 'scoped memory for tpu_custom_call.1']
    #allocation7 [shape = 'u8[4096]{0}', space=vmem, size = 0x1000, scoped, tag = 'output window, operand 0, single buffered']
    %11 = vsyncpa [#allocation3], 0
    %12 = vsyncpa [#allocation6], 0
    %13 = vsyncpa [#allocation4], 0
    // Predicated region
    $region2: #{tpu_custom_call.1} parent=1 // pred_check
      _
    $region3: #{tpu_custom_call.1} parent=1 // pred_check_branch
      %15 = sbr.rel (0) target = $region5
    $region4: #{tpu_custom_call.1} parent=1 // pred_region
      _
    $region5: #{tpu_custom_call.1} parent=1 // pred_fallthru
      _
    // Predicated region
    $region6: #{tpu_custom_call.1} parent=1 // pred_check
      _
    $region7: #{tpu_custom_call.1} parent=1 // pred_check_branch
      %17 = sbr.rel (0) target = $region9
    $region8: #{tpu_custom_call.1} parent=1 // pred_region
      _
    $region9: #{tpu_custom_call.1} parent=1 // pred_fallthru
      _
    // Predicated region
    $region10: #{tpu_custom_call.1} parent=1 // pred_check
      _
    $region11: #{tpu_custom_call.1} parent=1 // pred_check_branch
      %19 = sbr.rel (0) target = $region13
    $region12: #{tpu_custom_call.1} parent=1 // pred_region
      %s21 = ssub.s32 1024, 1024
      %22 = vsyncadd [#allocation3], %s21
      %s23 = sshll.u32 [#allocation2], 4
      %s24 = int_to_ptr.vmem [resolvable:$true] %s23
      %29 = dma.hbm_to_vmem [thread:$0]  %s2, 1024, %s24, [#allocation3], 64, 64, 4
    $region13: #{tpu_custom_call.1} parent=1 // pred_fallthru
      _
    // Predicated region
    $region14: #{tpu_custom_call.1} parent=1 // pred_check
      _
    $region15: #{tpu_custom_call.1} parent=1 // pred_check_branch
      %31 = sbr.rel (0) target = $region17
    $region16: #{tpu_custom_call.1} parent=1 // pred_region
      _
    $region17: #{tpu_custom_call.1} parent=1 // pred_fallthru
      _
    // Predicated region
    $region18: #{tpu_custom_call.1} parent=1 // pred_check
      _
    $region19: #{tpu_custom_call.1} parent=1 // pred_check_branch
      %33 = sbr.rel (0) target = $region21
    $region20: #{tpu_custom_call.1} parent=1 // pred_region
      %s35 = ssub.s32 1024, 1024
      %36 = vsyncadd [#allocation6], %s35
      %s37 = sshll.u32 [#allocation5], 4
      %s38 = int_to_ptr.vmem [resolvable:$true] %s37
      %43 = dma.hbm_to_vmem [thread:$0]  %s4, 1024, %s38, [#allocation6], 64, 64, 4
    $region21: #{tpu_custom_call.1} parent=1 // pred_fallthru
      _
    // Predicated region
    $region22: #{tpu_custom_call.1} parent=1 // pred_check
      _
    $region23: #{tpu_custom_call.1} parent=1 // pred_check_branch
      %45 = sbr.rel (0) target = $region25
    $region24: #{tpu_custom_call.1} parent=1 // pred_region
      _
    $region25: #{tpu_custom_call.1} parent=1 // pred_fallthru
      _
    // Predicated region
    $region26: #{tpu_custom_call.1} parent=1 // pred_check
      _
    $region27: #{tpu_custom_call.1} parent=1 // pred_check_branch
      %47 = sbr.rel (0) target = $region29
    $region28: #{tpu_custom_call.1} parent=1 // pred_region
      %48 = dma.done [#allocation3], 1024
    $region29: #{tpu_custom_call.1} parent=1 // pred_fallthru
      _
    // Predicated region
    $region30: #{tpu_custom_call.1} parent=1 // pred_check
      _
    $region31: #{tpu_custom_call.1} parent=1 // pred_check_branch
      %50 = sbr.rel (0) target = $region33
    $region32: #{tpu_custom_call.1} parent=1 // pred_region
      %51 = dma.done [#allocation6], 1024
    $region33: #{tpu_custom_call.1} parent=1 // pred_fallthru
      _
    %v53 = vld [vmem:[%s0] sm:$0xf]
    %v54 = vld [vmem:[%s0 + $0x4] sm:$0xf]
    %v55 = vld [vmem:[%s0 + $0x8] sm:$0xf]
    %v56 = vld [vmem:[%s0 + $0xc] sm:$0xf]
    %v57 = vld [vmem:[%s0 + $0x10] sm:$0xf]
    %v58 = vld [vmem:[%s0 + $0x14] sm:$0xf]
    %v59 = vld [vmem:[%s0 + $0x18] sm:$0xf]
    %v60 = vld [vmem:[%s0 + $0x1c] sm:$0xf]
    %v61 = vld [vmem:[%s1] sm:$0xf]
    %v62 = vld [vmem:[%s1 + $0x4] sm:$0xf]
    %v63 = vld [vmem:[%s1 + $0x8] sm:$0xf]
    %v64 = vld [vmem:[%s1 + $0xc] sm:$0xf]
    %v65 = vld [vmem:[%s3] sm:$0x1]
    %v67 = vlaneseq
    %v68 = vshrl.u32 %v67, 7
    %v69 = vsub.s32 0, %v68
    %v70 = vrot.slane %v65, %v69
    %v80 = vunpack.c.l.b16 %v53
    %v81 = vunpack.c.l.b16 %v54
    %v82 = vunpack.c.l.b16 %v55
    %v83 = vunpack.c.l.b16 %v56
    %v84 = vunpack.c.l.b16 %v57
    %v85 = vunpack.c.l.b16 %v58
    %v86 = vunpack.c.l.b16 %v59
    %v87 = vunpack.c.l.b16 %v60
    %v88 = vpack.c.b16 %v81, %v80
    %v89 = vpack.c.b16 %v83, %v82
    %v90 = vpack.c.b16 %v85, %v84
    %v91 = vpack.c.b16 %v87, %v86
    %v96 = vunpack.c.l.b16 %v61
    %v97 = vunpack.c.l.b16 %v62
    %v98 = vunpack.c.l.b16 %v63
    %v99 = vunpack.c.l.b16 %v64
    %v100 = vpack.c.b16 %v97, %v96
    %v101 = vpack.c.b16 %v99, %v98
    %vm104 = vcmask 261120
    %v106 = vsel %vm104, %v88, 0
    %v109 = vsel %vm104, %v89, 0
    %v112 = vsel %vm104, %v90, 0
    %v115 = vsel %vm104, %v91, 0
    %117 = vmatprep.subr.bf16.mxu0 0
    %118 = vmatpush1.bf16.msra.mxu0 %v100
    %119 = vmatprep.subr.bf16.mxu0 0
    %120 = vmatpush1.bf16.msra.mxu0 %v101
    %121 = vmatprep.subr.bf16.mxu0 0
    %122 = vmatpush1.bf16.msra.mxu0 0
    %123 = vmatprep.subr.bf16.mxu0 0
    %124 = vmatpush1.bf16.msra.mxu0 0
    %125 = vmatprep.subr.bf16.mxu0 0
    %126 = vmatpush1.bf16.msra.mxu0 0
    %127 = vmatprep.subr.bf16.mxu0 0
    %128 = vmatpush1.bf16.msra.mxu0 0
    %129 = vmatprep.subr.bf16.mxu0 0
    %130 = vmatpush1.bf16.msra.mxu0 0
    %131 = vmatprep.subr.bf16.mxu0 0
    %132 = vmatpush1.bf16.msra.mxu0 0
    %133 = vmatprep.subr.bf16.mxu0 0
    %134 = vmatpush1.bf16.msra.mxu0 0
    %135 = vmatprep.subr.bf16.mxu0 0
    %136 = vmatpush1.bf16.msra.mxu0 0
    %137 = vmatprep.subr.bf16.mxu0 0
    %138 = vmatpush1.bf16.msra.mxu0 0
    %139 = vmatprep.subr.bf16.mxu0 0
    %140 = vmatpush1.bf16.msra.mxu0 0
    %141 = vmatprep.subr.bf16.mxu0 0
    %142 = vmatpush1.bf16.msra.mxu0 0
    %143 = vmatprep.subr.bf16.mxu0 0
    %144 = vmatpush1.bf16.msra.mxu0 0
    %145 = vmatprep.subr.bf16.mxu0 0
    %146 = vmatpush1.bf16.msra.mxu0 0
    %147 = vmatprep.subr.bf16.mxu0 0
    %148 = vmatpush1.bf16.msra.mxu0 0
    %149 = vmatprep.mubr.bf16.mxu0 0
    %150 = vmatmul.mubr.bf16.gmra.mrb[0].mxu0 %v106
    %v151 = vpop.f32.mrb[0].mxu0
    %v152 = vadd.f32 %v70, %v151
    %v153 = vpop.f32.mrb[0].mxu0
    %v154 = vpop.f32.mrb[0].mxu0
    %v155 = vadd.f32 %v70, %v154
    %v156 = vpop.f32.mrb[0].mxu0
    %157 = vmatprep.mubr.bf16.mxu0 0
    %158 = vmatmul.mubr.bf16.gmra.mrb[0].mxu0 %v109
    %v159 = vpop.f32.mrb[0].mxu0
    %v160 = vadd.f32 %v70, %v159
    %v161 = vpop.f32.mrb[0].mxu0
    %v162 = vpop.f32.mrb[0].mxu0
    %v163 = vadd.f32 %v70, %v162
    %v164 = vpop.f32.mrb[0].mxu0
    %165 = vmatprep.mubr.bf16.mxu0 0
    %166 = vmatmul.mubr.bf16.gmra.mrb[0].mxu0 %v112
    %v167 = vpop.f32.mrb[0].mxu0
    %v168 = vadd.f32 %v70, %v167
    %v169 = vpop.f32.mrb[0].mxu0
    %v170 = vpop.f32.mrb[0].mxu0
    %v171 = vadd.f32 %v70, %v170
    %v172 = vpop.f32.mrb[0].mxu0
    %173 = vmatprep.mubr.bf16.mxu0 0
    %174 = vmatmul.mubr.bf16.gmra.mrb[0].mxu0 %v115
    %v175 = vpop.f32.mrb[0].mxu0
    %v176 = vadd.f32 %v70, %v175
    %v177 = vpop.f32.mrb[0].mxu0
    %v178 = vpop.f32.mrb[0].mxu0
    %v179 = vadd.f32 %v70, %v178
    %v180 = vpop.f32.mrb[0].mxu0
    %181 = vdwg.mxu0
    %v182 = vld [vmem:[#allocation2] sm:$0xf]
    %v183 = vld [vmem:[#allocation2 + $0x4] sm:$0xf]
    %v184 = vld [vmem:[#allocation2 + $0x8] sm:$0xf]
    %v185 = vld [vmem:[#allocation2 + $0xc] sm:$0xf]
    %v186 = vld [vmem:[#allocation2 + $0x10] sm:$0xf]
    %v187 = vld [vmem:[#allocation2 + $0x14] sm:$0xf]
    %v188 = vld [vmem:[#allocation2 + $0x18] sm:$0xf]
    %v189 = vld [vmem:[#allocation2 + $0x1c] sm:$0xf]
    %v190 = vld [vmem:[#allocation2 + $0x20] sm:$0xf]
    %v191 = vld [vmem:[#allocation2 + $0x24] sm:$0xf]
    %v192 = vld [vmem:[#allocation2 + $0x28] sm:$0xf]
    %v193 = vld [vmem:[#allocation2 + $0x2c] sm:$0xf]
    %v194 = vld [vmem:[#allocation2 + $0x30] sm:$0xf]
    %v195 = vld [vmem:[#allocation2 + $0x34] sm:$0xf]
    %v196 = vld [vmem:[#allocation2 + $0x38] sm:$0xf]
    %v197 = vld [vmem:[#allocation2 + $0x3c] sm:$0xf]
    %v198 = vtanh.pop %v152
    %v199 = vpack.c.bf16 %v198, %v198
    %v216 = vunpack.c.l.b16 %v182
    %v217 = vunpack.c.l.b16 %v183
    %v218 = vunpack.c.l.b16 %v184
    %v219 = vunpack.c.l.b16 %v185
    %v220 = vunpack.c.l.b16 %v186
    %v221 = vunpack.c.l.b16 %v187
    %v222 = vunpack.c.l.b16 %v188
    %v223 = vunpack.c.l.b16 %v189
    %v224 = vunpack.c.l.b16 %v190
    %v225 = vunpack.c.l.b16 %v191
    %v226 = vunpack.c.l.b16 %v192
    %v227 = vunpack.c.l.b16 %v193
    %v228 = vunpack.c.l.b16 %v194
    %v229 = vunpack.c.l.b16 %v195
    %v230 = vunpack.c.l.b16 %v196
    %v231 = vunpack.c.l.b16 %v197
    %v232 = vpack.c.b16 %v217, %v216
    %v233 = vpack.c.b16 %v219, %v218
    %v234 = vpack.c.b16 %v221, %v220
    %v235 = vpack.c.b16 %v223, %v222
    %v236 = vpack.c.b16 %v225, %v224
    %v237 = vpack.c.b16 %v227, %v226
    %v238 = vpack.c.b16 %v229, %v228
    %v239 = vpack.c.b16 %v231, %v230
    %248 = vmatprep.subr.bf16.mxu0 0
    %249 = vmatpush1.bf16.msra.mxu0 %v232
    %250 = vmatprep.subr.bf16.mxu0 0
    %251 = vmatpush1.bf16.msra.mxu0 %v233
    %252 = vmatprep.subr.bf16.mxu0 0
    %253 = vmatpush1.bf16.msra.mxu0 %v234
    %254 = vmatprep.subr.bf16.mxu0 0
    %255 = vmatpush1.bf16.msra.mxu0 %v235
    %256 = vmatprep.subr.bf16.mxu0 0
    %257 = vmatpush1.bf16.msra.mxu0 %v236
    %258 = vmatprep.subr.bf16.mxu0 0
    %259 = vmatpush1.bf16.msra.mxu0 %v237
    %260 = vmatprep.subr.bf16.mxu0 0
    %261 = vmatpush1.bf16.msra.mxu0 %v238
    %262 = vmatprep.subr.bf16.mxu0 0
    %263 = vmatpush1.bf16.msra.mxu0 %v239
    %264 = vmatprep.subr.bf16.mxu0 0
    %265 = vmatpush1.bf16.msra.mxu0 0
    %266 = vmatprep.subr.bf16.mxu0 0
    %267 = vmatpush1.bf16.msra.mxu0 0
    %268 = vmatprep.subr.bf16.mxu0 0
    %269 = vmatpush1.bf16.msra.mxu0 0
    %270 = vmatprep.subr.bf16.mxu0 0
    %271 = vmatpush1.bf16.msra.mxu0 0
    %272 = vmatprep.subr.bf16.mxu0 0
    %273 = vmatpush1.bf16.msra.mxu0 0
    %274 = vmatprep.subr.bf16.mxu0 0
    %275 = vmatpush1.bf16.msra.mxu0 0
    %276 = vmatprep.subr.bf16.mxu0 0
    %277 = vmatpush1.bf16.msra.mxu0 0
    %278 = vmatprep.subr.bf16.mxu0 0
    %279 = vmatpush1.bf16.msra.mxu0 0
    %280 = vmatprep.mubr.bf16.mxu0 0
    %281 = vmatmul.mubr.bf16.gmra.mrb[0].mxu0 %v199
    %v282 = vpop.f32.mrb[0].mxu0
    %v283 = vadd.f32 0.0, %v282
    %v284 = vpop.f32.mrb[0].mxu0
    %v285 = vpop.f32.mrb[0].mxu0
    %v286 = vpop.f32.mrb[0].mxu0
    %287 = vdwg.mxu0
    %v288 = vadd.f32 %v155, %v283
    %v289 = vtanh.pop %v288
    %v290 = vpack.c.bf16 %v289, %v289
    %291 = vmatprep.subr.bf16.mxu0 0
    %292 = vmatpush1.bf16.msra.mxu0 %v232
    %293 = vmatprep.subr.bf16.mxu0 0
    %294 = vmatpush1.bf16.msra.mxu0 %v233
    %295 = vmatprep.subr.bf16.mxu0 0
    %296 = vmatpush1.bf16.msra.mxu0 %v234
    %297 = vmatprep.subr.bf16.mxu0 0
    %298 = vmatpush1.bf16.msra.mxu0 %v235
    %299 = vmatprep.subr.bf16.mxu0 0
    %300 = vmatpush1.bf16.msra.mxu0 %v236
    %301 = vmatprep.subr.bf16.mxu0 0
    %302 = vmatpush1.bf16.msra.mxu0 %v237
    %303 = vmatprep.subr.bf16.mxu0 0
    %304 = vmatpush1.bf16.msra.mxu0 %v238
    %305 = vmatprep.subr.bf16.mxu0 0
    %306 = vmatpush1.bf16.msra.mxu0 %v239
    %307 = vmatprep.subr.bf16.mxu0 0
    %308 = vmatpush1.bf16.msra.mxu0 0
    %309 = vmatprep.subr.bf16.mxu0 0
    %310 = vmatpush1.bf16.msra.mxu0 0
    %311 = vmatprep.subr.bf16.mxu0 0
    %312 = vmatpush1.bf16.msra.mxu0 0
    %313 = vmatprep.subr.bf16.mxu0 0
    %314 = vmatpush1.bf16.msra.mxu0 0
    %315 = vmatprep.subr.bf16.mxu0 0
    %316 = vmatpush1.bf16.msra.mxu0 0
    %317 = vmatprep.subr.bf16.mxu0 0
    %318 = vmatpush1.bf16.msra.mxu0 0
    %319 = vmatprep.subr.bf16.mxu0 0
    %320 = vmatpush1.bf16.msra.mxu0 0
    %321 = vmatprep.subr.bf16.mxu0 0
    %322 = vmatpush1.bf16.msra.mxu0 0
    %323 = vmatprep.mubr.bf16.mxu0 0
    %324 = vmatmul.mubr.bf16.gmra.mrb[0].mxu0 %v290
    %v325 = vpop.f32.mrb[0].mxu0
    %v326 = vadd.f32 0.0, %v325
    %v327 = vpop.f32.mrb[0].mxu0
    %v328 = vpop.f32.mrb[0].mxu0
    %v329 = vpop.f32.mrb[0].mxu0
    %330 = vdwg.mxu0
    %v331 = vadd.f32 %v160, %v326
    %v332 = vtanh.pop %v331
    %v333 = vpack.c.bf16 %v332, %v332
    %334 = vmatprep.subr.bf16.mxu0 0
    %335 = vmatpush1.bf16.msra.mxu0 %v232
    %336 = vmatprep.subr.bf16.mxu0 0
    %337 = vmatpush1.bf16.msra.mxu0 %v233
    %338 = vmatprep.subr.bf16.mxu0 0
    %339 = vmatpush1.bf16.msra.mxu0 %v234
    %340 = vmatprep.subr.bf16.mxu0 0
    %341 = vmatpush1.bf16.msra.mxu0 %v235
    %342 = vmatprep.subr.bf16.mxu0 0
    %343 = vmatpush1.bf16.msra.mxu0 %v236
    %344 = vmatprep.subr.bf16.mxu0 0
    %345 = vmatpush1.bf16.msra.mxu0 %v237
    %346 = vmatprep.subr.bf16.mxu0 0
    %347 = vmatpush1.bf16.msra.mxu0 %v238
    %348 = vmatprep.subr.bf16.mxu0 0
    %349 = vmatpush1.bf16.msra.mxu0 %v239
    %350 = vmatprep.subr.bf16.mxu0 0
    %351 = vmatpush1.bf16.msra.mxu0 0
    %352 = vmatprep.subr.bf16.mxu0 0
    %353 = vmatpush1.bf16.msra.mxu0 0
    %354 = vmatprep.subr.bf16.mxu0 0
    %355 = vmatpush1.bf16.msra.mxu0 0
    %356 = vmatprep.subr.bf16.mxu0 0
    %357 = vmatpush1.bf16.msra.mxu0 0
    %358 = vmatprep.subr.bf16.mxu0 0
    %359 = vmatpush1.bf16.msra.mxu0 0
    %360 = vmatprep.subr.bf16.mxu0 0
    %361 = vmatpush1.bf16.msra.mxu0 0
    %362 = vmatprep.subr.bf16.mxu0 0
    %363 = vmatpush1.bf16.msra.mxu0 0
    %364 = vmatprep.subr.bf16.mxu0 0
    %365 = vmatpush1.bf16.msra.mxu0 0
    %366 = vmatprep.mubr.bf16.mxu0 0
    %367 = vmatmul.mubr.bf16.gmra.mrb[0].mxu0 %v333
    %v368 = vpop.f32.mrb[0].mxu0
    %v369 = vadd.f32 0.0, %v368
    %v370 = vpop.f32.mrb[0].mxu0
    %v371 = vpop.f32.mrb[0].mxu0
    %v372 = vpop.f32.mrb[0].mxu0
    %373 = vdwg.mxu0
    %v374 = vadd.f32 %v163, %v369
    %v375 = vtanh.pop %v374
    %v376 = vpack.c.bf16 %v375, %v375
    %377 = vmatprep.subr.bf16.mxu0 0
    %378 = vmatpush1.bf16.msra.mxu0 %v232
    %379 = vmatprep.subr.bf16.mxu0 0
    %380 = vmatpush1.bf16.msra.mxu0 %v233
    %381 = vmatprep.subr.bf16.mxu0 0
    %382 = vmatpush1.bf16.msra.mxu0 %v234
    %383 = vmatprep.subr.bf16.mxu0 0
    %384 = vmatpush1.bf16.msra.mxu0 %v235
    %385 = vmatprep.subr.bf16.mxu0 0
    %386 = vmatpush1.bf16.msra.mxu0 %v236
    %387 = vmatprep.subr.bf16.mxu0 0
    %388 = vmatpush1.bf16.msra.mxu0 %v237
    %389 = vmatprep.subr.bf16.mxu0 0
    %390 = vmatpush1.bf16.msra.mxu0 %v238
    %391 = vmatprep.subr.bf16.mxu0 0
    %392 = vmatpush1.bf16.msra.mxu0 %v239
    %393 = vmatprep.subr.bf16.mxu0 0
    %394 = vmatpush1.bf16.msra.mxu0 0
    %395 = vmatprep.subr.bf16.mxu0 0
    %396 = vmatpush1.bf16.msra.mxu0 0
    %397 = vmatprep.subr.bf16.mxu0 0
    %398 = vmatpush1.bf16.msra.mxu0 0
    %399 = vmatprep.subr.bf16.mxu0 0
    %400 = vmatpush1.bf16.msra.mxu0 0
    %401 = vmatprep.subr.bf16.mxu0 0
    %402 = vmatpush1.bf16.msra.mxu0 0
    %403 = vmatprep.subr.bf16.mxu0 0
    %404 = vmatpush1.bf16.msra.mxu0 0
    %405 = vmatprep.subr.bf16.mxu0 0
    %406 = vmatpush1.bf16.msra.mxu0 0
    %407 = vmatprep.subr.bf16.mxu0 0
    %408 = vmatpush1.bf16.msra.mxu0 0
    %409 = vmatprep.mubr.bf16.mxu0 0
    %410 = vmatmul.mubr.bf16.gmra.mrb[0].mxu0 %v376
    %v411 = vpop.f32.mrb[0].mxu0
    %v412 = vadd.f32 0.0, %v411
    %v413 = vpop.f32.mrb[0].mxu0
    %v414 = vpop.f32.mrb[0].mxu0
    %v415 = vpop.f32.mrb[0].mxu0
    %416 = vdwg.mxu0
    %v417 = vadd.f32 %v168, %v412
    %v418 = vtanh.pop %v417
    %v419 = vpack.c.bf16 %v418, %v418
    %420 = vmatprep.subr.bf16.mxu0 0
    %421 = vmatpush1.bf16.msra.mxu0 %v232
    %422 = vmatprep.subr.bf16.mxu0 0
    %423 = vmatpush1.bf16.msra.mxu0 %v233
    %424 = vmatprep.subr.bf16.mxu0 0
    %425 = vmatpush1.bf16.msra.mxu0 %v234
    %426 = vmatprep.subr.bf16.mxu0 0
    %427 = vmatpush1.bf16.msra.mxu0 %v235
    %428 = vmatprep.subr.bf16.mxu0 0
    %429 = vmatpush1.bf16.msra.mxu0 %v236
    %430 = vmatprep.subr.bf16.mxu0 0
    %431 = vmatpush1.bf16.msra.mxu0 %v237
    %432 = vmatprep.subr.bf16.mxu0 0
    %433 = vmatpush1.bf16.msra.mxu0 %v238
    %434 = vmatprep.subr.bf16.mxu0 0
    %435 = vmatpush1.bf16.msra.mxu0 %v239
    %436 = vmatprep.subr.bf16.mxu0 0
    %437 = vmatpush1.bf16.msra.mxu0 0
    %438 = vmatprep.subr.bf16.mxu0 0
    %439 = vmatpush1.bf16.msra.mxu0 0
    %440 = vmatprep.subr.bf16.mxu0 0
    %441 = vmatpush1.bf16.msra.mxu0 0
    %442 = vmatprep.subr.bf16.mxu0 0
    %443 = vmatpush1.bf16.msra.mxu0 0
    %444 = vmatprep.subr.bf16.mxu0 0
    %445 = vmatpush1.bf16.msra.mxu0 0
    %446 = vmatprep.subr.bf16.mxu0 0
    %447 = vmatpush1.bf16.msra.mxu0 0
    %448 = vmatprep.subr.bf16.mxu0 0
    %449 = vmatpush1.bf16.msra.mxu0 0
    %450 = vmatprep.subr.bf16.mxu0 0
    %451 = vmatpush1.bf16.msra.mxu0 0
    %452 = vmatprep.mubr.bf16.mxu0 0
    %453 = vmatmul.mubr.bf16.gmra.mrb[0].mxu0 %v419
    %v454 = vpop.f32.mrb[0].mxu0
    %v455 = vadd.f32 0.0, %v454
    %v456 = vpop.f32.mrb[0].mxu0
    %v457 = vpop.f32.mrb[0].mxu0
    %v458 = vpop.f32.mrb[0].mxu0
    %459 = vdwg.mxu0
    %v460 = vadd.f32 %v171, %v455
    %v461 = vtanh.pop %v460
    %v462 = vpack.c.bf16 %v461, %v461
    %463 = vmatprep.subr.bf16.mxu0 0
    %464 = vmatpush1.bf16.msra.mxu0 %v232
    %465 = vmatprep.subr.bf16.mxu0 0
    %466 = vmatpush1.bf16.msra.mxu0 %v233
    %467 = vmatprep.subr.bf16.mxu0 0
    %468 = vmatpush1.bf16.msra.mxu0 %v234
    %469 = vmatprep.subr.bf16.mxu0 0
    %470 = vmatpush1.bf16.msra.mxu0 %v235
    %471 = vmatprep.subr.bf16.mxu0 0
    %472 = vmatpush1.bf16.msra.mxu0 %v236
    %473 = vmatprep.subr.bf16.mxu0 0
    %474 = vmatpush1.bf16.msra.mxu0 %v237
    %475 = vmatprep.subr.bf16.mxu0 0
    %476 = vmatpush1.bf16.msra.mxu0 %v238
    %477 = vmatprep.subr.bf16.mxu0 0
    %478 = vmatpush1.bf16.msra.mxu0 %v239
    %479 = vmatprep.subr.bf16.mxu0 0
    %480 = vmatpush1.bf16.msra.mxu0 0
    %481 = vmatprep.subr.bf16.mxu0 0
    %482 = vmatpush1.bf16.msra.mxu0 0
    %483 = vmatprep.subr.bf16.mxu0 0
    %484 = vmatpush1.bf16.msra.mxu0 0
    %485 = vmatprep.subr.bf16.mxu0 0
    %486 = vmatpush1.bf16.msra.mxu0 0
    %487 = vmatprep.subr.bf16.mxu0 0
    %488 = vmatpush1.bf16.msra.mxu0 0
    %489 = vmatprep.subr.bf16.mxu0 0
    %490 = vmatpush1.bf16.msra.mxu0 0
    %491 = vmatprep.subr.bf16.mxu0 0
    %492 = vmatpush1.bf16.msra.mxu0 0
    %493 = vmatprep.subr.bf16.mxu0 0
    %494 = vmatpush1.bf16.msra.mxu0 0
    %495 = vmatprep.mubr.bf16.mxu0 0
    %496 = vmatmul.mubr.bf16.gmra.mrb[0].mxu0 %v462
    %v497 = vpop.f32.mrb[0].mxu0
    %v498 = vadd.f32 0.0, %v497
    %v499 = vpop.f32.mrb[0].mxu0
    %v500 = vpop.f32.mrb[0].mxu0
    %v501 = vpop.f32.mrb[0].mxu0
    %502 = vdwg.mxu0
    %v503 = vadd.f32 %v176, %v498
    %v504 = vtanh.pop %v503
    %v505 = vpack.c.bf16 %v504, %v504
    %506 = vmatprep.subr.bf16.mxu0 0
    %507 = vmatpush1.bf16.msra.mxu0 %v232
    %508 = vmatprep.subr.bf16.mxu0 0
    %509 = vmatpush1.bf16.msra.mxu0 %v233
    %510 = vmatprep.subr.bf16.mxu0 0
    %511 = vmatpush1.bf16.msra.mxu0 %v234
    %512 = vmatprep.subr.bf16.mxu0 0
    %513 = vmatpush1.bf16.msra.mxu0 %v235
    %514 = vmatprep.subr.bf16.mxu0 0
    %515 = vmatpush1.bf16.msra.mxu0 %v236
    %516 = vmatprep.subr.bf16.mxu0 0
    %517 = vmatpush1.bf16.msra.mxu0 %v237
    %518 = vmatprep.subr.bf16.mxu0 0
    %519 = vmatpush1.bf16.msra.mxu0 %v238
    %520 = vmatprep.subr.bf16.mxu0 0
    %521 = vmatpush1.bf16.msra.mxu0 %v239
    %522 = vmatprep.subr.bf16.mxu0 0
    %523 = vmatpush1.bf16.msra.mxu0 0
    %524 = vmatprep.subr.bf16.mxu0 0
    %525 = vmatpush1.bf16.msra.mxu0 0
    %526 = vmatprep.subr.bf16.mxu0 0
    %527 = vmatpush1.bf16.msra.mxu0 0
    %528 = vmatprep.subr.bf16.mxu0 0
    %529 = vmatpush1.bf16.msra.mxu0 0
    %530 = vmatprep.subr.bf16.mxu0 0
    %531 = vmatpush1.bf16.msra.mxu0 0
    %532 = vmatprep.subr.bf16.mxu0 0
    %533 = vmatpush1.bf16.msra.mxu0 0
    %534 = vmatprep.subr.bf16.mxu0 0
    %535 = vmatpush1.bf16.msra.mxu0 0
    %536 = vmatprep.subr.bf16.mxu0 0
    %537 = vmatpush1.bf16.msra.mxu0 0
    %538 = vmatprep.mubr.bf16.mxu0 0
    %539 = vmatmul.mubr.bf16.gmra.mrb[0].mxu0 %v505
    %v540 = vpop.f32.mrb[0].mxu0
    %v541 = vadd.f32 0.0, %v540
    %v542 = vpop.f32.mrb[0].mxu0
    %v543 = vpop.f32.mrb[0].mxu0
    %v544 = vpop.f32.mrb[0].mxu0
    %545 = vdwg.mxu0
    %v546 = vadd.f32 %v179, %v541
    %v547 = vtanh.pop %v546
    %v548 = vpack.c.bf16 %v547, %v547
    %v549 = vld [vmem:[#allocation5] sm:$0xf]
    %v550 = vld [vmem:[#allocation5 + $0x4] sm:$0xf]
    %v551 = vld [vmem:[#allocation5 + $0x8] sm:$0xf]
    %v552 = vld [vmem:[#allocation5 + $0xc] sm:$0xf]
    %v553 = vld [vmem:[#allocation5 + $0x10] sm:$0xf]
    %v554 = vld [vmem:[#allocation5 + $0x14] sm:$0xf]
    %v555 = vld [vmem:[#allocation5 + $0x18] sm:$0xf]
    %v556 = vld [vmem:[#allocation5 + $0x1c] sm:$0xf]
    %v557 = vld [vmem:[#allocation5 + $0x20] sm:$0xf]
    %v558 = vld [vmem:[#allocation5 + $0x24] sm:$0xf]
    %v559 = vld [vmem:[#allocation5 + $0x28] sm:$0xf]
    %v560 = vld [vmem:[#allocation5 + $0x2c] sm:$0xf]
    %v561 = vld [vmem:[#allocation5 + $0x30] sm:$0xf]
    %v562 = vld [vmem:[#allocation5 + $0x34] sm:$0xf]
    %v563 = vld [vmem:[#allocation5 + $0x38] sm:$0xf]
    %v564 = vld [vmem:[#allocation5 + $0x3c] sm:$0xf]
    %v565 = vld [vmem:[%s5] sm:$0x1]
    %v567 = vlaneseq
    %v568 = vshrl.u32 %v567, 7
    %v569 = vsub.s32 0, %v568
    %v570 = vrot.slane %v565, %v569
    %v588 = vunpack.c.l.b16 %v549
    %v589 = vunpack.c.l.b16 %v550
    %v590 = vunpack.c.l.b16 %v551
    %v591 = vunpack.c.l.b16 %v552
    %v592 = vunpack.c.l.b16 %v553
    %v593 = vunpack.c.l.b16 %v554
    %v594 = vunpack.c.l.b16 %v555
    %v595 = vunpack.c.l.b16 %v556
    %v596 = vunpack.c.l.b16 %v557
    %v597 = vunpack.c.l.b16 %v558
    %v598 = vunpack.c.l.b16 %v559
    %v599 = vunpack.c.l.b16 %v560
    %v600 = vunpack.c.l.b16 %v561
    %v601 = vunpack.c.l.b16 %v562
    %v602 = vunpack.c.l.b16 %v563
    %v603 = vunpack.c.l.b16 %v564
    %v604 = vpack.c.b16 %v589, %v588
    %v605 = vpack.c.b16 %v591, %v590
    %v606 = vpack.c.b16 %v593, %v592
    %v607 = vpack.c.b16 %v595, %v594
    %v608 = vpack.c.b16 %v597, %v596
    %v609 = vpack.c.b16 %v599, %v598
    %v610 = vpack.c.b16 %v601, %v600
    %v611 = vpack.c.b16 %v603, %v602
    %620 = vmatprep.subr.bf16.mxu0 0
    %621 = vmatpush1.bf16.msra.mxu0 %v604
    %622 = vmatprep.subr.bf16.mxu0 0
    %623 = vmatpush1.bf16.msra.mxu0 %v605
    %624 = vmatprep.subr.bf16.mxu0 0
    %625 = vmatpush1.bf16.msra.mxu0 %v606
    %626 = vmatprep.subr.bf16.mxu0 0
    %627 = vmatpush1.bf16.msra.mxu0 %v607
    %628 = vmatprep.subr.bf16.mxu0 0
    %629 = vmatpush1.bf16.msra.mxu0 %v608
    %630 = vmatprep.subr.bf16.mxu0 0
    %631 = vmatpush1.bf16.msra.mxu0 %v609
    %632 = vmatprep.subr.bf16.mxu0 0
    %633 = vmatpush1.bf16.msra.mxu0 %v610
    %634 = vmatprep.subr.bf16.mxu0 0
    %635 = vmatpush1.bf16.msra.mxu0 %v611
    %636 = vmatprep.subr.bf16.mxu0 0
    %637 = vmatpush1.bf16.msra.mxu0 0
    %638 = vmatprep.subr.bf16.mxu0 0
    %639 = vmatpush1.bf16.msra.mxu0 0
    %640 = vmatprep.subr.bf16.mxu0 0
    %641 = vmatpush1.bf16.msra.mxu0 0
    %642 = vmatprep.subr.bf16.mxu0 0
    %643 = vmatpush1.bf16.msra.mxu0 0
    %644 = vmatprep.subr.bf16.mxu0 0
    %645 = vmatpush1.bf16.msra.mxu0 0
    %646 = vmatprep.subr.bf16.mxu0 0
    %647 = vmatpush1.bf16.msra.mxu0 0
    %648 = vmatprep.subr.bf16.mxu0 0
    %649 = vmatpush1.bf16.msra.mxu0 0
    %650 = vmatprep.subr.bf16.mxu0 0
    %651 = vmatpush1.bf16.msra.mxu0 0
    %652 = vmatprep.mubr.bf16.mxu0 0
    %653 = vmatmul.mubr.bf16.gmra.mrb[0].mxu0 %v548
    %v654 = vpop.f32.mrb[0].mxu0
    %v655 = vadd.f32 %v570, %v654
    %v656 = vpop.f32.mrb[0].mxu0
    %v657 = vpop.f32.mrb[0].mxu0
    %v658 = vpop.f32.mrb[0].mxu0
    %659 = vdwg.mxu0
    %660 = vst [vmem:[#allocation7] sm:$0xff] %v655
    // Predicated region
    $region34: #{tpu_custom_call.1} parent=1 // pred_check
      _
    $region35: #{tpu_custom_call.1} parent=1 // pred_check_branch
      %662 = sbr.rel (0) target = $region37
    $region36: #{tpu_custom_call.1} parent=1 // pred_region
      %s664 = ssub.s32 128, 128
      %665 = vsyncadd [#allocation4], %s664
      %s667 = sshll.u32 [#allocation7], 4
      %s668 = int_to_ptr.vmem [resolvable:$true] %s667
      %670 = dma.vmem_to_hbm [thread:$0]  %s668, 128, %s6, [#allocation4]
    $region37: #{tpu_custom_call.1} parent=1 // pred_fallthru
      _
    // Predicated region
    $region38: #{tpu_custom_call.1} parent=1 // pred_check
      _
    $region39: #{tpu_custom_call.1} parent=1 // pred_check_branch
      %672 = sbr.rel (0) target = $region41
    $region40: #{tpu_custom_call.1} parent=1 // pred_region
      %673 = dma.done [#allocation4], 128
    $region41: #{tpu_custom_call.1} parent=1 // pred_fallthru
      _
    %674 = vsyncpa [#allocation3], 1
    %675 = vsyncpa [#allocation6], 1
    %676 = vsyncpa [#allocation4], 1

</llo_original>
